<compile_context>
chip_gen: v7x
topology: tpu7x:2x2x1
jax: 0.10.0
libtpu: 0.0.40
codegen_flags: <defaults>
</compile_context>

<pallas_src>
import functools

import jax
import jax.numpy as jnp
from jax import lax
from jax.experimental import pallas as pl
from jax.experimental.pallas import tpu as pltpu


def _round_up(n, m):
    return ((n + m - 1) // m) * m


def octinet_kernel(x_ref, w1_ref, b1_ref, w2_ref, b2_ref, w3_ref, b3_ref, o_ref):
    """One batch tile: x (bm, 64) row-major in -> y (1, bm) lane-dense out."""
    cdt = w1_ref.dtype                        # MXU operand dtype (bf16 or f32)

    # On-chip cast: x comes straight from HBM in its native dtype (single HBM pass);
    # the cast to the MXU operand dtype runs on the VPU, not as an extra HBM pass.
    x = x_ref[...].astype(cdt)                # (bm, 64)

    # Layer 1: contract the feature dim of both operands -> feature-major (128, bm).
    # Equivalent to W1 @ x^T with the transpose folded into the MXU operand path.
    h1 = lax.dot_general(w1_ref[...], x, (((1,), (1,)), ((), ())),
                         preferred_element_type=jnp.float32)
    h1 = jnp.maximum(h1 + b1_ref[...], 0.0)   # f32 epilogue (v5e-safe VPU)

    # Layer 2: (64, 128) @ (128, bm) -> (64, bm), f32 accumulate.
    h2 = jnp.dot(w2_ref[...], h1.astype(cdt), preferred_element_type=jnp.float32)
    h2 = jnp.maximum(h2 + b2_ref[...], 0.0)

    # Layer 3 off the MXU: VPU broadcast-mul by the w3 column + sublane reduction,
    # keeping the MXU free for the next tile's layer 1.  Lane-dense (1, bm) store.
    y = jnp.sum(h2 * w3_ref[...], axis=0, keepdims=True) + b3_ref[0]   # (1, bm)
    o_ref[...] = y.astype(o_ref.dtype)


@functools.partial(jax.jit, static_argnames=("bm", "compute_dtype"))
def octinet_forward(x, params, *, bm=2048, compute_dtype=jnp.bfloat16):
    """x: (B, 64) float32. params: torch-layout weights/biases. Returns (B, 1) f32."""
    B, D = x.shape
    assert D == 64

    # Batch tile: multiple of 128 (lane-dense output), capped by `bm`, by the rounded
    # batch itself, and so large batches keep >= ~8 tiles for v7x 2-TC load balance.
    bm_eff = max(128, min(bm, _round_up(pl.cdiv(B, 8), 128), _round_up(B, 128)))
    n_tiles = pl.cdiv(B, bm_eff)
    B_pad = n_tiles * bm_eff

    # No transpose / cast of x in HBM; only pad the batch tail when needed.
    x_in = x if B_pad == B else jnp.pad(x, ((0, B_pad - B), (0, 0)))

    # Weight casts / reshapes constant-fold under jit.
    w1 = params["w1"].astype(compute_dtype)                  # (128, 64)
    w2 = params["w2"].astype(compute_dtype)                  # (64, 128)
    w3 = params["w3"].reshape(64, 1).astype(jnp.float32)     # column for VPU layer 3
    b1 = params["b1"].reshape(128, 1).astype(jnp.float32)
    b2 = params["b2"].reshape(64, 1).astype(jnp.float32)
    b3 = params["b3"].reshape(1).astype(jnp.float32)         # SMEM scalar

    # Constant index_map: block stays VMEM-resident across all grid steps (no re-DMA).
    def resident(shape):
        return pl.BlockSpec(shape, lambda i, _n=len(shape): (0,) * _n)

    out = pl.pallas_call(
        octinet_kernel,
        out_shape=jax.ShapeDtypeStruct((1, B_pad), jnp.float32),
        grid_spec=pltpu.PrefetchScalarGridSpec(
            num_scalar_prefetch=0,
            grid=(n_tiles,),
            in_specs=[
                pl.BlockSpec((bm_eff, 64), lambda i: (i, 0)),        # x batch tile
                resident(w1.shape), resident(b1.shape),
                resident(w2.shape), resident(b2.shape),
                resident(w3.shape),
                pl.BlockSpec(memory_space=pltpu.MemorySpace.SMEM),   # b3 scalar
            ],
            out_specs=pl.BlockSpec((1, bm_eff), lambda i: (0, i)),   # lane-dense out
        ),
        compiler_params=pltpu.CompilerParams(
            # Batch tiles are independent -> megacore / 2-TC sharding on v7x.
            dimension_semantics=("parallel",),
        ),
    )(x_in, w1, b1, w2, b2, w3, b3)

    return out[0, :B].reshape(B, 1)


def init_params(key):
    """Deterministic init matching torch nn.Linear layouts: W is (out, in), b is (out,)."""
    ks = jax.random.split(key, 6)

    def linear(kw, kb, fan_in, fan_out):
        bound = 1.0 / jnp.sqrt(jnp.float32(fan_in))   # torch default U(-1/sqrt(in), ..)
        w = jax.random.uniform(kw, (fan_out, fan_in), jnp.float32, -bound, bound)
        b = jax.random.uniform(kb, (fan_out,), jnp.float32, -bound, bound)
        return w, b

    w1, b1 = linear(ks[0], ks[1], 64, 128)
    w2, b2 = linear(ks[2], ks[3], 128, 64)
    w3, b3 = linear(ks[4], ks[5], 64, 1)
    return {"w1": w1, "b1": b1, "w2": w2, "b2": b2, "w3": w3, "b3": b3}


def octinet_reference(x, p, compute_dtype=jnp.float32):
    """Pure-JAX reference mirroring the kernel's precision (operand dtype, f32 acc)."""
    cdt = compute_dtype
    h1 = jnp.maximum(
        jnp.dot(x.astype(cdt), p["w1"].astype(cdt).T,
                preferred_element_type=jnp.float32) + p["b1"], 0.0)
    h2 = jnp.maximum(
        jnp.dot(h1.astype(cdt), p["w2"].astype(cdt).T,
                preferred_element_type=jnp.float32) + p["b2"], 0.0)
    return jnp.dot(h2, p["w3"].T) + p["b3"]   # layer 3 in f32, like the kernel


if __name__ == "__main__":
    key = jax.random.PRNGKey(0)
    k_x, k_p = jax.random.split(key)
    B = 300                      # small, not a multiple of 128 -> exercises padded tail
    x = jax.random.normal(k_x, (B, 64), jnp.float32)
    params = init_params(k_p)

    # Default path: bf16 MXU operands, f32 accumulation + f32 epilogue.
    out = jax.block_until_ready(octinet_forward(x, params))
    ref = octinet_reference(x, params, compute_dtype=jnp.bfloat16)
    assert out.shape == (B, 1)
    err = float(jnp.max(jnp.abs(out - ref)))
    assert err < 3e-2, err

    # f32 MXU path (tight structural check).
    out32 = jax.block_until_ready(
        octinet_forward(x, params, compute_dtype=jnp.float32))
    ref32 = octinet_reference(x, params, compute_dtype=jnp.float32)
    err32 = float(jnp.max(jnp.abs(out32 - ref32)))
    assert err32 < 1e-4, err32

    print("KERNEL_OK")
</pallas_src>

<mosaic_0001>
module attributes {stable_mosaic.version = 11 : i64} {
  func.func @octinet_kernel(%arg0: i32, %arg1: memref<128x64xf32, #tpu.memory_space<vmem>>, %arg2: memref<128x64xbf16, #tpu.memory_space<vmem>>, %arg3: memref<128x1xf32, #tpu.memory_space<vmem>>, %arg4: memref<64x128xbf16, #tpu.memory_space<vmem>>, %arg5: memref<64x1xf32, #tpu.memory_space<vmem>>, %arg6: memref<64x1xf32, #tpu.memory_space<vmem>>, %arg7: memref<1xf32, #tpu.memory_space<smem>>, %arg8: memref<1x128xf32, #tpu.memory_space<vmem>>) attributes {dimension_semantics = [#tpu.dimension_semantics<parallel>], iteration_bounds = array<i64: 3>, scalar_prefetch = 0 : i64, scratch_operands = 0 : i64, tpu.core_type = #tpu.core_type<tc>, window_params = [{transform_indices = @transform_0, window_bounds = array<i64: 128, 64>}, {pipeline_mode = #tpu.pipeline_mode<synchronous>, transform_indices = @transform_1, window_bounds = array<i64: 128, 64>}, {pipeline_mode = #tpu.pipeline_mode<synchronous>, transform_indices = @transform_2, window_bounds = array<i64: 128, 1>}, {pipeline_mode = #tpu.pipeline_mode<synchronous>, transform_indices = @transform_3, window_bounds = array<i64: 64, 128>}, {pipeline_mode = #tpu.pipeline_mode<synchronous>, transform_indices = @transform_4, window_bounds = array<i64: 64, 1>}, {pipeline_mode = #tpu.pipeline_mode<synchronous>, transform_indices = @transform_5, window_bounds = array<i64: 64, 1>}, {transform_indices = @transform_6, window_bounds = array<i64: 1>}, {transform_indices = @transform_7, window_bounds = array<i64: 1, 128>}]} {
    %c0 = arith.constant 0 : index
    %c0_0 = arith.constant 0 : index
    %0 = vector.load %arg1[%c0, %c0_0] : memref<128x64xf32, #tpu.memory_space<vmem>>, vector<128x64xf32>
    %1 = arith.truncf %0 : vector<128x64xf32> to vector<128x64xbf16>
    %c0_1 = arith.constant 0 : index
    %c0_2 = arith.constant 0 : index
    %2 = vector.load %arg2[%c0_1, %c0_2] : memref<128x64xbf16, #tpu.memory_space<vmem>>, vector<128x64xbf16>
    %cst = arith.constant dense<0.000000e+00> : vector<128x128xf32>
    %3 = tpu.matmul %2, %1, %cst {dimension_numbers = #tpu.dot_dimension_numbers<[1], [1], [0], [0], [0, 0, 1, 0], [], []>} : vector<128x64xbf16>, vector<128x64xbf16>, vector<128x128xf32> -> vector<128x128xf32>
    %c0_3 = arith.constant 0 : index
    %c0_4 = arith.constant 0 : index
    %4 = vector.load %arg3[%c0_3, %c0_4] : memref<128x1xf32, #tpu.memory_space<vmem>>, vector<128x1xf32>
    %5 = vector.broadcast %4 : vector<128x1xf32> to vector<128x128xf32>
    %6 = arith.addf %3, %5 : vector<128x128xf32>
    %cst_5 = arith.constant 0.000000e+00 : f32
    %7 = vector.broadcast %cst_5 : f32 to vector<128x128xf32>
    %8 = arith.maximumf %6, %7 : vector<128x128xf32>
    %c0_6 = arith.constant 0 : index
    %c0_7 = arith.constant 0 : index
    %9 = vector.load %arg4[%c0_6, %c0_7] : memref<64x128xbf16, #tpu.memory_space<vmem>>, vector<64x128xbf16>
    %10 = arith.truncf %8 : vector<128x128xf32> to vector<128x128xbf16>
    %cst_8 = arith.constant dense<0.000000e+00> : vector<64x128xf32>
    %11 = tpu.matmul %9, %10, %cst_8 {dimension_numbers = #tpu.dot_dimension_numbers<[1], [0], [0], [1], [0, 0, 1, 1], [], []>} : vector<64x128xbf16>, vector<128x128xbf16>, vector<64x128xf32> -> vector<64x128xf32>
    %c0_9 = arith.constant 0 : index
    %c0_10 = arith.constant 0 : index
    %12 = vector.load %arg5[%c0_9, %c0_10] : memref<64x1xf32, #tpu.memory_space<vmem>>, vector<64x1xf32>
    %13 = vector.broadcast %12 : vector<64x1xf32> to vector<64x128xf32>
    %14 = arith.addf %11, %13 : vector<64x128xf32>
    %cst_11 = arith.constant 0.000000e+00 : f32
    %15 = vector.broadcast %cst_11 : f32 to vector<64x128xf32>
    %16 = arith.maximumf %14, %15 : vector<64x128xf32>
    %c0_12 = arith.constant 0 : index
    %c0_13 = arith.constant 0 : index
    %17 = vector.load %arg6[%c0_12, %c0_13] : memref<64x1xf32, #tpu.memory_space<vmem>>, vector<64x1xf32>
    %18 = vector.broadcast %17 : vector<64x1xf32> to vector<64x128xf32>
    %19 = arith.mulf %16, %18 : vector<64x128xf32>
    %cst_14 = arith.constant dense<0.000000e+00> : vector<128xf32>
    %20 = vector.multi_reduction <add>, %19, %cst_14 [0] : vector<64x128xf32> to vector<128xf32>
    %21 = vector.shape_cast %20 : vector<128xf32> to vector<1x128xf32>
    %c0_15 = arith.constant 0 : index
    %22 = memref.load %arg7[%c0_15] : memref<1xf32, #tpu.memory_space<smem>>
    %23 = vector.broadcast %22 : f32 to vector<1x128xf32>
    %24 = arith.addf %21, %23 : vector<1x128xf32>
    %c0_16 = arith.constant 0 : index
    %c0_17 = arith.constant 0 : index
    %25 = vector.load %arg8[%c0_16, %c0_17] : memref<1x128xf32, #tpu.memory_space<vmem>>, vector<1x128xf32>
    tpu.vector_store %arg8[%c0_16, %c0_17], %24 {strides = array<i32>} : memref<1x128xf32, #tpu.memory_space<vmem>>, vector<1x128xf32>,
    return
  }
  func.func @transform_0(%arg0: i32) -> (i32, i32) {
    %c0_i32 = arith.constant 0 : i32
    %c0_i32_0 = arith.constant 0 : i32
    return %arg0, %c0_i32 : i32, i32
  }
  func.func @transform_1(%arg0: i32) -> (i32, i32) {
    %c0_i32 = arith.constant 0 : i32
    %c0_i32_0 = arith.constant 0 : i32
    %c0_i32_1 = arith.constant 0 : i32
    return %c0_i32, %c0_i32_0 : i32, i32
  }
  func.func @transform_2(%arg0: i32) -> (i32, i32) {
    %c0_i32 = arith.constant 0 : i32
    %c0_i32_0 = arith.constant 0 : i32
    %c0_i32_1 = arith.constant 0 : i32
    return %c0_i32, %c0_i32_0 : i32, i32
  }
  func.func @transform_3(%arg0: i32) -> (i32, i32) {
    %c0_i32 = arith.constant 0 : i32
    %c0_i32_0 = arith.constant 0 : i32
    %c0_i32_1 = arith.constant 0 : i32
    return %c0_i32, %c0_i32_0 : i32, i32
  }
  func.func @transform_4(%arg0: i32) -> (i32, i32) {
    %c0_i32 = arith.constant 0 : i32
    %c0_i32_0 = arith.constant 0 : i32
    %c0_i32_1 = arith.constant 0 : i32
    return %c0_i32, %c0_i32_0 : i32, i32
  }
  func.func @transform_5(%arg0: i32) -> (i32, i32) {
    %c0_i32 = arith.constant 0 : i32
    %c0_i32_0 = arith.constant 0 : i32
    %c0_i32_1 = arith.constant 0 : i32
    return %c0_i32, %c0_i32_0 : i32, i32
  }
  func.func @transform_6(%arg0: i32) -> i32 {
    %c0_i32 = arith.constant 0 : i32
    %c0_i32_0 = arith.constant 0 : i32
    return %c0_i32 : i32
  }
  func.func @transform_7(%arg0: i32) -> (i32, i32) {
    %c0_i32 = arith.constant 0 : i32
    %c0_i32_0 = arith.constant 0 : i32
    return %c0_i32, %arg0 : i32, i32
  }
}

</mosaic_0001>

<llo_original>
// kernel: octinet_forward.1
$region0: #{octinet_forward.1}
  #allocation0 [shape = 'u32[]', space=smem, size = 0x4, offset = 0x4, fixed_abs, tag = 'smem constant byte address 0x4 - core index']
  #allocation1 [shape = 'u32[144,128]{1,0:T(1,128)}', space=vmem, size = 0x12000, scoped, tag = 'internal scratch']
  #allocation2 [shape = 'f32[1]{0:T(128)S(6)}', space=smem, size = 0x200, scoped, tag = 'scoped memory for octinet_forward.1']
  %s0 = inlined_call_operand.vmem [shape: f32[384,64], index: 0, kind: input, shape index: {}]
  %s1 = inlined_call_operand.vmem [shape: bf16[128,64], index: 1, kind: input, shape index: {}]
  %s2 = inlined_call_operand.vmem [shape: f32[128,1], index: 2, kind: input, shape index: {}]
  %s3 = inlined_call_operand.vmem [shape: bf16[64,128], index: 3, kind: input, shape index: {}]
  %s4 = inlined_call_operand.vmem [shape: f32[64,1], index: 4, kind: input, shape index: {}]
  %s5 = inlined_call_operand.vmem [shape: f32[64,1], index: 5, kind: input, shape index: {}]
  %s6 = inlined_call_operand.<no memory space> [shape: f32[1], index: 6, kind: input, shape index: {}]
  %s7 = inlined_call_operand.vmem [shape: f32[1,384], index: 7, kind: output, shape index: {}]
  %s8 = sld [smem:[#allocation0]]
  $region61: #{octinet_forward.1} parent=0
    _
  %s10 = ssub.s32 1, %s8
  %s11 = scalar_select 0, %s10, %s8
  %12 = sst [smem:[#allocation2]] %s6
  loop: start=0, step=1, limit=5
  $region2: #{octinet_forward.1} parent=0 // loop_pre_header
    _
  $region3: #{octinet_forward.1} parent=0 // loop_header
    %s14 = sphi 0, %s18
    %p15 = scmp.ge.s32.totalorder %s14, 5
    %s24 = sphi 0, %s26
    %s27 = sphi 0, %s24
    %s28 = sphi 0, %s27
    %s44 = sphi 0, %s28
    %s48 = sphi 0, %s48
    %s50 = sphi 0, %s48
    %s51 = sphi 0, %s50
    %s65 = sphi 0, %s51
    %s69 = sphi 0, %s69
    %s71 = sphi 0, %s69
    %s72 = sphi 0, %s71
    %s86 = sphi 0, %s72
    %s90 = sphi 0, %s90
    %s92 = sphi 0, %s90
    %s93 = sphi 0, %s92
    %s107 = sphi 0, %s93
    %s111 = sphi 0, %s111
    %s113 = sphi 0, %s111
    %s114 = sphi 0, %s113
    %s128 = sphi 0, %s114
    %s132 = sphi 0, %s132
    %s134 = sphi 0, %s132
    %s135 = sphi 0, %s134
    %s149 = sphi 0, %s135
    %s153 = sphi 0, %s153
    %s155 = sphi 0, %s153
    %s156 = sphi 0, %s155
    %s170 = sphi 0, %s156
    %s176 = sphi 0, %s178
    %s179 = sphi 0, %s176
    %s180 = sphi 0, %s179
    %s196 = sphi 0, %s180
  $region4: #{octinet_forward.1} parent=0 // loop_header_branch
    %17 = sbr.rel (%p15) target = $region8
  $region5: #{octinet_forward.1} parent=0 // loop_body
    %s19 = ssub.s32 %s14, 1
    %s20 = ssub.s32 %s14, 2
    %s21 = sadd.s32 %s14, 1
    %s22 = ssub.s32 %s14, %s21
    %p23 = scmp.eq.s32.totalorder %s22, 0
    %s25 = sadd.s32 %s24, 1
    %s26 = scalar_select %p23, %s24, %s25
    %p29 = pneg %p23
    %p30 = scmp.eq.s32.totalorder %s14, 2
    %p31 = por %p29, %p30
    %p32 = scmp.ne.s32.totalorder %s24, %s27
    %p33 = scmp.eq.s32.totalorder %s14, 0
    %p34 = por %p32, %p33
    %p35 = scmp.ne.s32.totalorder %s24, %s27
    %p36 = scmp.eq.s32.totalorder %s19, 2
    %p37 = por %p35, %p36
    %p38 = scmp.ne.s32.totalorder %s27, %s28
    %p39 = scmp.eq.s32.totalorder %s19, 0
    %p40 = por %p38, %p39
    %p41 = scmp.ne.s32.totalorder %s27, %s28
    %p42 = scmp.eq.s32.totalorder %s20, 2
    %p43 = por %p41, %p42
    %p45 = scmp.ne.s32.totalorder %s28, %s44
    %p46 = scmp.eq.s32.totalorder %s20, 0
    %p47 = por %p45, %p46
    %s49 = sadd.s32 %s48, 1
    %p52 = scmp.eq.s32.totalorder %s14, 2
    %p53 = scmp.ne.s32.totalorder %s48, %s50
    %p54 = scmp.eq.s32.totalorder %s14, 0
    %p55 = por %p53, %p54
    %p56 = scmp.ne.s32.totalorder %s48, %s50
    %p57 = scmp.eq.s32.totalorder %s19, 2
    %p58 = por %p56, %p57
    %p59 = scmp.ne.s32.totalorder %s50, %s51
    %p60 = scmp.eq.s32.totalorder %s19, 0
    %p61 = por %p59, %p60
    %p62 = scmp.ne.s32.totalorder %s50, %s51
    %p63 = scmp.eq.s32.totalorder %s20, 2
    %p64 = por %p62, %p63
    %p66 = scmp.ne.s32.totalorder %s51, %s65
    %p67 = scmp.eq.s32.totalorder %s20, 0
    %p68 = por %p66, %p67
    %s70 = sadd.s32 %s69, 1
    %p73 = scmp.eq.s32.totalorder %s14, 2
    %p74 = scmp.ne.s32.totalorder %s69, %s71
    %p75 = scmp.eq.s32.totalorder %s14, 0
    %p76 = por %p74, %p75
    %p77 = scmp.ne.s32.totalorder %s69, %s71
    %p78 = scmp.eq.s32.totalorder %s19, 2
    %p79 = por %p77, %p78
    %p80 = scmp.ne.s32.totalorder %s71, %s72
    %p81 = scmp.eq.s32.totalorder %s19, 0
    %p82 = por %p80, %p81
    %p83 = scmp.ne.s32.totalorder %s71, %s72
    %p84 = scmp.eq.s32.totalorder %s20, 2
    %p85 = por %p83, %p84
    %p87 = scmp.ne.s32.totalorder %s72, %s86
    %p88 = scmp.eq.s32.totalorder %s20, 0
    %p89 = por %p87, %p88
    %s91 = sadd.s32 %s90, 1
    %p94 = scmp.eq.s32.totalorder %s14, 2
    %p95 = scmp.ne.s32.totalorder %s90, %s92
    %p96 = scmp.eq.s32.totalorder %s14, 0
    %p97 = por %p95, %p96
    %p98 = scmp.ne.s32.totalorder %s90, %s92
    %p99 = scmp.eq.s32.totalorder %s19, 2
    %p100 = por %p98, %p99
    %p101 = scmp.ne.s32.totalorder %s92, %s93
    %p102 = scmp.eq.s32.totalorder %s19, 0
    %p103 = por %p101, %p102
    %p104 = scmp.ne.s32.totalorder %s92, %s93
    %p105 = scmp.eq.s32.totalorder %s20, 2
    %p106 = por %p104, %p105
    %p108 = scmp.ne.s32.totalorder %s93, %s107
    %p109 = scmp.eq.s32.totalorder %s20, 0
    %p110 = por %p108, %p109
    %s112 = sadd.s32 %s111, 1
    %p115 = scmp.eq.s32.totalorder %s14, 2
    %p116 = scmp.ne.s32.totalorder %s111, %s113
    %p117 = scmp.eq.s32.totalorder %s14, 0
    %p118 = por %p116, %p117
    %p119 = scmp.ne.s32.totalorder %s111, %s113
    %p120 = scmp.eq.s32.totalorder %s19, 2
    %p121 = por %p119, %p120
    %p122 = scmp.ne.s32.totalorder %s113, %s114
    %p123 = scmp.eq.s32.totalorder %s19, 0
    %p124 = por %p122, %p123
    %p125 = scmp.ne.s32.totalorder %s113, %s114
    %p126 = scmp.eq.s32.totalorder %s20, 2
    %p127 = por %p125, %p126
    %p129 = scmp.ne.s32.totalorder %s114, %s128
    %p130 = scmp.eq.s32.totalorder %s20, 0
    %p131 = por %p129, %p130
    %s133 = sadd.s32 %s132, 1
    %p136 = scmp.eq.s32.totalorder %s14, 2
    %p137 = scmp.ne.s32.totalorder %s132, %s134
    %p138 = scmp.eq.s32.totalorder %s14, 0
    %p139 = por %p137, %p138
    %p140 = scmp.ne.s32.totalorder %s132, %s134
    %p141 = scmp.eq.s32.totalorder %s19, 2
    %p142 = por %p140, %p141
    %p143 = scmp.ne.s32.totalorder %s134, %s135
    %p144 = scmp.eq.s32.totalorder %s19, 0
    %p145 = por %p143, %p144
    %p146 = scmp.ne.s32.totalorder %s134, %s135
    %p147 = scmp.eq.s32.totalorder %s20, 2
    %p148 = por %p146, %p147
    %p150 = scmp.ne.s32.totalorder %s135, %s149
    %p151 = scmp.eq.s32.totalorder %s20, 0
    %p152 = por %p150, %p151
    %s154 = sadd.s32 %s153, 1
    %p157 = scmp.eq.s32.totalorder %s14, 2
    %p158 = scmp.ne.s32.totalorder %s153, %s155
    %p159 = scmp.eq.s32.totalorder %s14, 0
    %p160 = por %p158, %p159
    %p161 = scmp.ne.s32.totalorder %s153, %s155
    %p162 = scmp.eq.s32.totalorder %s19, 2
    %p163 = por %p161, %p162
    %p164 = scmp.ne.s32.totalorder %s155, %s156
    %p165 = scmp.eq.s32.totalorder %s19, 0
    %p166 = por %p164, %p165
    %p167 = scmp.ne.s32.totalorder %s155, %s156
    %p168 = scmp.eq.s32.totalorder %s20, 2
    %p169 = por %p167, %p168
    %p171 = scmp.ne.s32.totalorder %s156, %s170
    %p172 = scmp.eq.s32.totalorder %s20, 0
    %p173 = por %p171, %p172
    %s174 = ssub.s32 %s14, %s21
    %p175 = scmp.eq.s32.totalorder %s174, 0
    %s177 = sadd.s32 %s176, 1
    %s178 = scalar_select %p175, %s176, %s177
    %p181 = pneg %p175
    %p182 = scmp.eq.s32.totalorder %s14, 2
    %p183 = por %p181, %p182
    %p184 = scmp.ne.s32.totalorder %s176, %s179
    %p185 = scmp.eq.s32.totalorder %s14, 0
    %p186 = por %p184, %p185
    %p187 = scmp.ne.s32.totalorder %s176, %s179
    %p188 = scmp.eq.s32.totalorder %s19, 2
    %p189 = por %p187, %p188
    %p190 = scmp.ne.s32.totalorder %s179, %s180
    %p191 = scmp.eq.s32.totalorder %s19, 0
    %p192 = por %p190, %p191
    %p193 = scmp.ne.s32.totalorder %s179, %s180
    %p194 = scmp.eq.s32.totalorder %s20, 2
    %p195 = por %p193, %p194
    %p197 = scmp.ne.s32.totalorder %s180, %s196
    %p198 = scmp.eq.s32.totalorder %s20, 0
    %p199 = por %p197, %p198
    %p200 = scmp.le.s32.totalorder 1, %s14
    %p201 = scmp.lt.s32.totalorder %s14, 4
    %p202 = pnand %p200, %p201
    %p203 = pneg %p202
    // Predicated region
    $region9: #{octinet_forward.1} parent=5 // pred_check
      _
    $region10: #{octinet_forward.1} parent=5 // pred_check_branch
      %205 = sbr.rel (%p202) target = $region12
    $region11: #{octinet_forward.1} parent=5 // pred_region
      %s206 = ssub.s32 %s14, 1
      // Predicated region
      $region13: #{octinet_forward.1} parent=11 // pred_check
        %p207 = pneg %p61
      $region14: #{octinet_forward.1} parent=11 // pred_check_branch
        %209 = sbr.rel (%p207) target = $region16
      $region15: #{octinet_forward.1} parent=11 // pred_region
        _
      $region16: #{octinet_forward.1} parent=11 // pred_fallthru
        _
      // Predicated region
      $region17: #{octinet_forward.1} parent=11 // pred_check
        %p210 = pneg %p82
      $region18: #{octinet_forward.1} parent=11 // pred_check_branch
        %212 = sbr.rel (%p210) target = $region20
      $region19: #{octinet_forward.1} parent=11 // pred_region
        _
      $region20: #{octinet_forward.1} parent=11 // pred_fallthru
        _
      // Predicated region
      $region21: #{octinet_forward.1} parent=11 // pred_check
        %p213 = pneg %p103
      $region22: #{octinet_forward.1} parent=11 // pred_check_branch
        %215 = sbr.rel (%p213) target = $region24
      $region23: #{octinet_forward.1} parent=11 // pred_region
        _
      $region24: #{octinet_forward.1} parent=11 // pred_fallthru
        _
      // Predicated region
      $region25: #{octinet_forward.1} parent=11 // pred_check
        %p216 = pneg %p124
      $region26: #{octinet_forward.1} parent=11 // pred_check_branch
        %218 = sbr.rel (%p216) target = $region28
      $region27: #{octinet_forward.1} parent=11 // pred_region
        _
      $region28: #{octinet_forward.1} parent=11 // pred_fallthru
        _
      // Predicated region
      $region29: #{octinet_forward.1} parent=11 // pred_check
        %p219 = pneg %p145
      $region30: #{octinet_forward.1} parent=11 // pred_check_branch
        %221 = sbr.rel (%p219) target = $region32
      $region31: #{octinet_forward.1} parent=11 // pred_region
        _
      $region32: #{octinet_forward.1} parent=11 // pred_fallthru
        _
      // Predicated region
      $region33: #{octinet_forward.1} parent=11 // pred_check
        %p222 = pneg %p166
      $region34: #{octinet_forward.1} parent=11 // pred_check_branch
        %224 = sbr.rel (%p222) target = $region36
      $region35: #{octinet_forward.1} parent=11 // pred_region
        _
      $region36: #{octinet_forward.1} parent=11 // pred_fallthru
        _
    $region12: #{octinet_forward.1} parent=5 // pred_fallthru
      _
    %p225 = scmp.lt.s32.totalorder %s14, 3
    // Predicated region
    $region37: #{octinet_forward.1} parent=5 // pred_check
      %p226 = pneg %p225
    $region38: #{octinet_forward.1} parent=5 // pred_check_branch
      %228 = sbr.rel (%p226) target = $region40
    $region39: #{octinet_forward.1} parent=5 // pred_region
      // Predicated region
      $region41: #{octinet_forward.1} parent=39 // pred_check
        %p229 = pneg %p34
      $region42: #{octinet_forward.1} parent=39 // pred_check_branch
        %231 = sbr.rel (%p229) target = $region44
      $region43: #{octinet_forward.1} parent=39 // pred_region
        %s232 = smul.u32 16, %s14
        %p233 = scmp.lt.s32.totalorder %s232, 47
        %s234 = scalar_select %p233, %s232, 47
        %s235 = smul.addr %s234, 8
        %s236 = scalar_lea.vmem %s0, %s235
        %s237 = smul.u32 16, %s14
      $region44: #{octinet_forward.1} parent=39 // pred_fallthru
        _
    $region40: #{octinet_forward.1} parent=5 // pred_fallthru
      _
    %p238 = scmp.le.s32.totalorder 1, %s14
    %p239 = scmp.lt.s32.totalorder %s14, 4
    %p240 = pnand %p238, %p239
    %p241 = pneg %p240
    // Predicated region
    $region45: #{octinet_forward.1} parent=5 // pred_check
      _
    $region46: #{octinet_forward.1} parent=5 // pred_check_branch
      %243 = sbr.rel (%p240) target = $region48
    $region47: #{octinet_forward.1} parent=5 // pred_region
      %s244 = ssub.s32 %s14, 1
      %s245 = smul.u32 16, %s19
      %p246 = scmp.lt.s32.totalorder %s245, 47
      %s247 = scalar_select %p246, %s245, 47
      %s248 = smul.addr %s247, 8
      %s249 = scalar_lea.vmem %s0, %s248
      %p250 = pneg %p40
      %p251 = pneg %p37
      %p252 = pneg %p61
      %p253 = pneg %p58
      %p254 = pneg %p82
      %p255 = pneg %p79
      %p256 = pneg %p103
      %p257 = pneg %p100
      %p258 = pneg %p124
      %p259 = pneg %p121
      %p260 = pneg %p145
      %p261 = pneg %p142
      %p262 = pneg %p166
      %p263 = pneg %p163
      %p264 = pneg %p192
      %p265 = pneg %p189
      %p266 = scmp.lt.s32.totalorder %s19, 2
      %s267 = scalar_select %p266, %s19, 2
      %s268 = scalar_lea.vmem %s7, %s267
      %s269 = smul.u32 16, %s19
      %p270 = scmp.lt.s32.totalorder %s269, 47
      %s271 = scalar_select %p270, %s269, 47
      %s272 = smul.addr %s271, 8
      %s273 = scalar_lea.vmem %s0, %s272
      %s274 = smul.u32 16, %s19
      %p275 = scmp.lt.s32.totalorder %s19, 2
      %s276 = scalar_select %p275, %s19, 2
      %s277 = scalar_lea.vmem %s7, %s276
      %v279 = vld [vmem:[%s273] sm:$0xff]
      %v280 = vld [vmem:[%s273 + $0x8] sm:$0xff]
      %v281 = vld [vmem:[%s273 + $0x10] sm:$0xff]
      %v282 = vld [vmem:[%s273 + $0x18] sm:$0xff]
      %v283 = vld [vmem:[%s273 + $0x20] sm:$0xff]
      %v284 = vld [vmem:[%s273 + $0x28] sm:$0xff]
      %v285 = vld [vmem:[%s273 + $0x30] sm:$0xff]
      %v286 = vld [vmem:[%s273 + $0x38] sm:$0xff]
      %v287 = vld [vmem:[%s273 + $0x40] sm:$0xff]
      %v288 = vld [vmem:[%s273 + $0x48] sm:$0xff]
      %v289 = vld [vmem:[%s273 + $0x50] sm:$0xff]
      %v290 = vld [vmem:[%s273 + $0x58] sm:$0xff]
      %v291 = vld [vmem:[%s273 + $0x60] sm:$0xff]
      %v292 = vld [vmem:[%s273 + $0x68] sm:$0xff]
      %v293 = vld [vmem:[%s273 + $0x70] sm:$0xff]
      %v294 = vld [vmem:[%s273 + $0x78] sm:$0xff]
      %v295 = vpack.c.bf16 %v280, %v279
      %v296 = vpack.c.bf16 %v282, %v281
      %v297 = vpack.c.bf16 %v284, %v283
      %v298 = vpack.c.bf16 %v286, %v285
      %v299 = vpack.c.bf16 %v288, %v287
      %v300 = vpack.c.bf16 %v290, %v289
      %v301 = vpack.c.bf16 %v292, %v291
      %v302 = vpack.c.bf16 %v294, %v293
      %v303 = vld [vmem:[%s1] sm:$0xf]
      %v304 = vld [vmem:[%s1 + $0x4] sm:$0xf]
      %v305 = vld [vmem:[%s1 + $0x8] sm:$0xf]
      %v306 = vld [vmem:[%s1 + $0xc] sm:$0xf]
      %v307 = vld [vmem:[%s1 + $0x10] sm:$0xf]
      %v308 = vld [vmem:[%s1 + $0x14] sm:$0xf]
      %v309 = vld [vmem:[%s1 + $0x18] sm:$0xf]
      %v310 = vld [vmem:[%s1 + $0x1c] sm:$0xf]
      %v311 = vld [vmem:[%s1 + $0x20] sm:$0xf]
      %v312 = vld [vmem:[%s1 + $0x24] sm:$0xf]
      %v313 = vld [vmem:[%s1 + $0x28] sm:$0xf]
      %v314 = vld [vmem:[%s1 + $0x2c] sm:$0xf]
      %v315 = vld [vmem:[%s1 + $0x30] sm:$0xf]
      %v316 = vld [vmem:[%s1 + $0x34] sm:$0xf]
      %v317 = vld [vmem:[%s1 + $0x38] sm:$0xf]
      %v318 = vld [vmem:[%s1 + $0x3c] sm:$0xf]
      %v319 = vld [vmem:[%s2] sm:$0xff]
      %v320 = vld [vmem:[%s2 + $0x8] sm:$0xff]
      %v321 = vld [vmem:[%s2 + $0x10] sm:$0xff]
      %v322 = vld [vmem:[%s2 + $0x18] sm:$0xff]
      %v323 = vld [vmem:[%s2 + $0x20] sm:$0xff]
      %v324 = vld [vmem:[%s2 + $0x28] sm:$0xff]
      %v325 = vld [vmem:[%s2 + $0x30] sm:$0xff]
      %v326 = vld [vmem:[%s2 + $0x38] sm:$0xff]
      %v327 = vld [vmem:[%s2 + $0x40] sm:$0xff]
      %v328 = vld [vmem:[%s2 + $0x48] sm:$0xff]
      %v329 = vld [vmem:[%s2 + $0x50] sm:$0xff]
      %v330 = vld [vmem:[%s2 + $0x58] sm:$0xff]
      %v331 = vld [vmem:[%s2 + $0x60] sm:$0xff]
      %v332 = vld [vmem:[%s2 + $0x68] sm:$0xff]
      %v333 = vld [vmem:[%s2 + $0x70] sm:$0xff]
      %v334 = vld [vmem:[%s2 + $0x78] sm:$0xff]
      %336 = vset.pattern.permute.xlu0 0
      %337 = vperm.xlu0 %336, %v319
      %v338 = vpop.permute.xlu0 %337
      %341 = vset.pattern.permute.xlu0 0
      %342 = vperm.xlu0 %341, %v320
      %v343 = vpop.permute.xlu0 %342
      %346 = vset.pattern.permute.xlu0 0
      %347 = vperm.xlu0 %346, %v321
      %v348 = vpop.permute.xlu0 %347
      %351 = vset.pattern.permute.xlu0 0
      %352 = vperm.xlu0 %351, %v322
      %v353 = vpop.permute.xlu0 %352
      %356 = vset.pattern.permute.xlu0 0
      %357 = vperm.xlu0 %356, %v323
      %v358 = vpop.permute.xlu0 %357
      %361 = vset.pattern.permute.xlu0 0
      %362 = vperm.xlu0 %361, %v324
      %v363 = vpop.permute.xlu0 %362
      %366 = vset.pattern.permute.xlu0 0
      %367 = vperm.xlu0 %366, %v325
      %v368 = vpop.permute.xlu0 %367
      %371 = vset.pattern.permute.xlu0 0
      %372 = vperm.xlu0 %371, %v326
      %v373 = vpop.permute.xlu0 %372
      %376 = vset.pattern.permute.xlu0 0
      %377 = vperm.xlu0 %376, %v327
      %v378 = vpop.permute.xlu0 %377
      %381 = vset.pattern.permute.xlu0 0
      %382 = vperm.xlu0 %381, %v328
      %v383 = vpop.permute.xlu0 %382
      %386 = vset.pattern.permute.xlu0 0
      %387 = vperm.xlu0 %386, %v329
      %v388 = vpop.permute.xlu0 %387
      %391 = vset.pattern.permute.xlu0 0
      %392 = vperm.xlu0 %391, %v330
      %v393 = vpop.permute.xlu0 %392
      %396 = vset.pattern.permute.xlu0 0
      %397 = vperm.xlu0 %396, %v331
      %v398 = vpop.permute.xlu0 %397
      %401 = vset.pattern.permute.xlu0 0
      %402 = vperm.xlu0 %401, %v332
      %v403 = vpop.permute.xlu0 %402
      %406 = vset.pattern.permute.xlu0 0
      %407 = vperm.xlu0 %406, %v333
      %v408 = vpop.permute.xlu0 %407
      %411 = vset.pattern.permute.xlu0 0
      %412 = vperm.xlu0 %411, %v334
      %v413 = vpop.permute.xlu0 %412
      %v431 = vunpack.c.l.b16 %v303
      %v432 = vunpack.c.l.b16 %v304
      %v433 = vunpack.c.l.b16 %v305
      %v434 = vunpack.c.l.b16 %v306
      %v435 = vunpack.c.l.b16 %v307
      %v436 = vunpack.c.l.b16 %v308
      %v437 = vunpack.c.l.b16 %v309
      %v438 = vunpack.c.l.b16 %v310
      %v439 = vunpack.c.l.b16 %v311
      %v440 = vunpack.c.l.b16 %v312
      %v441 = vunpack.c.l.b16 %v313
      %v442 = vunpack.c.l.b16 %v314
      %v443 = vunpack.c.l.b16 %v315
      %v444 = vunpack.c.l.b16 %v316
      %v445 = vunpack.c.l.b16 %v317
      %v446 = vunpack.c.l.b16 %v318
      %v447 = vpack.c.b16 %v432, %v431
      %v448 = vpack.c.b16 %v434, %v433
      %v449 = vpack.c.b16 %v436, %v435
      %v450 = vpack.c.b16 %v438, %v437
      %v451 = vpack.c.b16 %v440, %v439
      %v452 = vpack.c.b16 %v442, %v441
      %v453 = vpack.c.b16 %v444, %v443
      %v454 = vpack.c.b16 %v446, %v445
      %vm455 = vcmask 523264
      %v457 = vsel %vm455, %v447, 0
      %v460 = vsel %vm455, %v448, 0
      %v463 = vsel %vm455, %v449, 0
      %v466 = vsel %vm455, %v450, 0
      %v469 = vsel %vm455, %v451, 0
      %v472 = vsel %vm455, %v452, 0
      %v475 = vsel %vm455, %v453, 0
      %v478 = vsel %vm455, %v454, 0
      %v481 = vsel %vm455, %v295, 0
      %v484 = vsel %vm455, %v296, 0
      %v487 = vsel %vm455, %v297, 0
      %v490 = vsel %vm455, %v298, 0
      %v493 = vsel %vm455, %v299, 0
      %v496 = vsel %vm455, %v300, 0
      %v499 = vsel %vm455, %v301, 0
      %v502 = vsel %vm455, %v302, 0
      %504 = vmatprep.subr.bf16.mxu0 0
      %505 = vmatpush1.bf16.xpose.msra.mxu0 %v481
      %506 = vmatprep.subr.bf16.mxu0 0
      %507 = vmatpush1.bf16.xpose.msra.mxu0 %v484
      %508 = vmatprep.subr.bf16.mxu0 0
      %509 = vmatpush1.bf16.xpose.msra.mxu0 %v487
      %510 = vmatprep.subr.bf16.mxu0 0
      %511 = vmatpush1.bf16.xpose.msra.mxu0 %v490
      %512 = vmatprep.subr.bf16.mxu0 0
      %513 = vmatpush1.bf16.xpose.msra.mxu0 %v493
      %514 = vmatprep.subr.bf16.mxu0 0
      %515 = vmatpush1.bf16.xpose.msra.mxu0 %v496
      %516 = vmatprep.subr.bf16.mxu0 0
      %517 = vmatpush1.bf16.xpose.msra.mxu0 %v499
      %518 = vmatprep.subr.bf16.mxu0 0
      %519 = vmatpush1.bf16.xpose.msra.mxu0 %v502
      %520 = vmatprep.subr.bf16.mxu0 0
      %521 = vmatpush1.bf16.xpose.msra.mxu0 0
      %522 = vmatprep.subr.bf16.mxu0 0
      %523 = vmatpush1.bf16.xpose.msra.mxu0 0
      %524 = vmatprep.subr.bf16.mxu0 0
      %525 = vmatpush1.bf16.xpose.msra.mxu0 0
      %526 = vmatprep.subr.bf16.mxu0 0
      %527 = vmatpush1.bf16.xpose.msra.mxu0 0
      %528 = vmatprep.subr.bf16.mxu0 0
      %529 = vmatpush1.bf16.xpose.msra.mxu0 0
      %530 = vmatprep.subr.bf16.mxu0 0
      %531 = vmatpush1.bf16.xpose.msra.mxu0 0
      %532 = vmatprep.subr.bf16.mxu0 0
      %533 = vmatpush1.bf16.xpose.msra.mxu0 0
      %534 = vmatprep.subr.bf16.mxu0 0
      %535 = vmatpush1.bf16.xpose.msra.mxu0 0
      %536 = vmatprep.mubr.bf16.mxu0 0
      %537 = vmatmul.mubr.bf16.gmra.mrb[0].mxu0 %v457
      %v538 = vpop.f32.mrb[0].mxu0
      %v539 = vadd.f32 %v338, %v538
      %v540 = vpop.f32.mrb[0].mxu0
      %v541 = vpop.f32.mrb[0].mxu0
      %v542 = vadd.f32 %v343, %v541
      %v543 = vpop.f32.mrb[0].mxu0
      %544 = vmatprep.mubr.bf16.mxu0 0
      %545 = vmatmul.mubr.bf16.gmra.mrb[0].mxu0 %v460
      %v546 = vpop.f32.mrb[0].mxu0
      %v547 = vadd.f32 %v348, %v546
      %v548 = vpop.f32.mrb[0].mxu0
      %v549 = vpop.f32.mrb[0].mxu0
      %v550 = vadd.f32 %v353, %v549
      %v551 = vpop.f32.mrb[0].mxu0
      %552 = vmatprep.mubr.bf16.mxu0 0
      %553 = vmatmul.mubr.bf16.gmra.mrb[0].mxu0 %v463
      %v554 = vpop.f32.mrb[0].mxu0
      %v555 = vadd.f32 %v358, %v554
      %v556 = vpop.f32.mrb[0].mxu0
      %v557 = vpop.f32.mrb[0].mxu0
      %v558 = vadd.f32 %v363, %v557
      %v559 = vpop.f32.mrb[0].mxu0
      %560 = vmatprep.mubr.bf16.mxu0 0
      %561 = vmatmul.mubr.bf16.gmra.mrb[0].mxu0 %v466
      %v562 = vpop.f32.mrb[0].mxu0
      %v563 = vadd.f32 %v368, %v562
      %v564 = vpop.f32.mrb[0].mxu0
      %v565 = vpop.f32.mrb[0].mxu0
      %v566 = vadd.f32 %v373, %v565
      %v567 = vpop.f32.mrb[0].mxu0
      %568 = vmatprep.mubr.bf16.mxu0 0
      %569 = vmatmul.mubr.bf16.gmra.mrb[0].mxu0 %v469
      %v570 = vpop.f32.mrb[0].mxu0
      %v571 = vadd.f32 %v378, %v570
      %v572 = vpop.f32.mrb[0].mxu0
      %v573 = vpop.f32.mrb[0].mxu0
      %v574 = vadd.f32 %v383, %v573
      %v575 = vpop.f32.mrb[0].mxu0
      %576 = vmatprep.mubr.bf16.mxu0 0
      %577 = vmatmul.mubr.bf16.gmra.mrb[0].mxu0 %v472
      %v578 = vpop.f32.mrb[0].mxu0
      %v579 = vadd.f32 %v388, %v578
      %v580 = vpop.f32.mrb[0].mxu0
      %v581 = vpop.f32.mrb[0].mxu0
      %v582 = vadd.f32 %v393, %v581
      %v583 = vpop.f32.mrb[0].mxu0
      %584 = vmatprep.mubr.bf16.mxu0 0
      %585 = vmatmul.mubr.bf16.gmra.mrb[0].mxu0 %v475
      %v586 = vpop.f32.mrb[0].mxu0
      %v587 = vadd.f32 %v398, %v586
      %v588 = vpop.f32.mrb[0].mxu0
      %v589 = vpop.f32.mrb[0].mxu0
      %v590 = vadd.f32 %v403, %v589
      %v591 = vpop.f32.mrb[0].mxu0
      %592 = vmatprep.mubr.bf16.mxu0 0
      %593 = vmatmul.mubr.bf16.gmra.mrb[0].mxu0 %v478
      %v594 = vpop.f32.mrb[0].mxu0
      %v595 = vadd.f32 %v408, %v594
      %v596 = vpop.f32.mrb[0].mxu0
      %v597 = vpop.f32.mrb[0].mxu0
      %v598 = vadd.f32 %v413, %v597
      %v599 = vpop.f32.mrb[0].mxu0
      %600 = vdwg.mxu0
      %v601 = vmax.f32 %v539, 0.0
      %v602 = vmax.f32 %v542, 0.0
      %v603 = vmax.f32 %v547, 0.0
      %v604 = vmax.f32 %v550, 0.0
      %v605 = vmax.f32 %v555, 0.0
      %v606 = vmax.f32 %v558, 0.0
      %v607 = vmax.f32 %v563, 0.0
      %v608 = vmax.f32 %v566, 0.0
      %v609 = vmax.f32 %v571, 0.0
      %v610 = vmax.f32 %v574, 0.0
      %v611 = vmax.f32 %v579, 0.0
      %v612 = vmax.f32 %v582, 0.0
      %v613 = vmax.f32 %v587, 0.0
      %v614 = vmax.f32 %v590, 0.0
      %v615 = vmax.f32 %v595, 0.0
      %v616 = vmax.f32 %v598, 0.0
      %v617 = vld [vmem:[%s3] sm:$0xf]
      %v618 = vld [vmem:[%s3 + $0x4] sm:$0xf]
      %v619 = vld [vmem:[%s3 + $0x8] sm:$0xf]
      %v620 = vld [vmem:[%s3 + $0xc] sm:$0xf]
      %v621 = vld [vmem:[%s3 + $0x10] sm:$0xf]
      %v622 = vld [vmem:[%s3 + $0x14] sm:$0xf]
      %v623 = vld [vmem:[%s3 + $0x18] sm:$0xf]
      %v624 = vld [vmem:[%s3 + $0x1c] sm:$0xf]
      %v625 = vpack.c.bf16 %v602, %v601
      %v626 = vpack.c.bf16 %v604, %v603
      %v627 = vpack.c.bf16 %v606, %v605
      %v628 = vpack.c.bf16 %v608, %v607
      %v629 = vpack.c.bf16 %v610, %v609
      %v630 = vpack.c.bf16 %v612, %v611
      %v631 = vpack.c.bf16 %v614, %v613
      %v632 = vpack.c.bf16 %v616, %v615
      %v633 = vld [vmem:[%s4] sm:$0xff]
      %v634 = vld [vmem:[%s4 + $0x8] sm:$0xff]
      %v635 = vld [vmem:[%s4 + $0x10] sm:$0xff]
      %v636 = vld [vmem:[%s4 + $0x18] sm:$0xff]
      %v637 = vld [vmem:[%s4 + $0x20] sm:$0xff]
      %v638 = vld [vmem:[%s4 + $0x28] sm:$0xff]
      %v639 = vld [vmem:[%s4 + $0x30] sm:$0xff]
      %v640 = vld [vmem:[%s4 + $0x38] sm:$0xff]
      %642 = vset.pattern.permute.xlu0 0
      %643 = vperm.xlu0 %642, %v633
      %v644 = vpop.permute.xlu0 %643
      %647 = vset.pattern.permute.xlu0 0
      %648 = vperm.xlu0 %647, %v634
      %v649 = vpop.permute.xlu0 %648
      %652 = vset.pattern.permute.xlu0 0
      %653 = vperm.xlu0 %652, %v635
      %v654 = vpop.permute.xlu0 %653
      %657 = vset.pattern.permute.xlu0 0
      %658 = vperm.xlu0 %657, %v636
      %v659 = vpop.permute.xlu0 %658
      %662 = vset.pattern.permute.xlu0 0
      %663 = vperm.xlu0 %662, %v637
      %v664 = vpop.permute.xlu0 %663
      %667 = vset.pattern.permute.xlu0 0
      %668 = vperm.xlu0 %667, %v638
      %v669 = vpop.permute.xlu0 %668
      %672 = vset.pattern.permute.xlu0 0
      %673 = vperm.xlu0 %672, %v639
      %v674 = vpop.permute.xlu0 %673
      %677 = vset.pattern.permute.xlu0 0
      %678 = vperm.xlu0 %677, %v640
      %v679 = vpop.permute.xlu0 %678
      %v689 = vunpack.c.l.b16 %v617
      %v690 = vunpack.c.l.b16 %v618
      %v691 = vunpack.c.l.b16 %v619
      %v692 = vunpack.c.l.b16 %v620
      %v693 = vunpack.c.l.b16 %v621
      %v694 = vunpack.c.l.b16 %v622
      %v695 = vunpack.c.l.b16 %v623
      %v696 = vunpack.c.l.b16 %v624
      %v697 = vpack.c.b16 %v690, %v689
      %v698 = vpack.c.b16 %v692, %v691
      %v699 = vpack.c.b16 %v694, %v693
      %v700 = vpack.c.b16 %v696, %v695
      %705 = vmatprep.subr.bf16.mxu0 0
      %706 = vmatpush1.bf16.msra.mxu0 %v625
      %707 = vmatprep.subr.bf16.mxu0 0
      %708 = vmatpush1.bf16.msra.mxu0 %v626
      %709 = vmatprep.subr.bf16.mxu0 0
      %710 = vmatpush1.bf16.msra.mxu0 %v627
      %711 = vmatprep.subr.bf16.mxu0 0
      %712 = vmatpush1.bf16.msra.mxu0 %v628
      %713 = vmatprep.subr.bf16.mxu0 0
      %714 = vmatpush1.bf16.msra.mxu0 %v629
      %715 = vmatprep.subr.bf16.mxu0 0
      %716 = vmatpush1.bf16.msra.mxu0 %v630
      %717 = vmatprep.subr.bf16.mxu0 0
      %718 = vmatpush1.bf16.msra.mxu0 %v631
      %719 = vmatprep.subr.bf16.mxu0 0
      %720 = vmatpush1.bf16.msra.mxu0 %v632
      %721 = vmatprep.subr.bf16.mxu0 0
      %722 = vmatpush1.bf16.msra.mxu0 0
      %723 = vmatprep.subr.bf16.mxu0 0
      %724 = vmatpush1.bf16.msra.mxu0 0
      %725 = vmatprep.subr.bf16.mxu0 0
      %726 = vmatpush1.bf16.msra.mxu0 0
      %727 = vmatprep.subr.bf16.mxu0 0
      %728 = vmatpush1.bf16.msra.mxu0 0
      %729 = vmatprep.subr.bf16.mxu0 0
      %730 = vmatpush1.bf16.msra.mxu0 0
      %731 = vmatprep.subr.bf16.mxu0 0
      %732 = vmatpush1.bf16.msra.mxu0 0
      %733 = vmatprep.subr.bf16.mxu0 0
      %734 = vmatpush1.bf16.msra.mxu0 0
      %735 = vmatprep.subr.bf16.mxu0 0
      %736 = vmatpush1.bf16.msra.mxu0 0
      %737 = vmatprep.mubr.bf16.mxu0 0
      %738 = vmatmul.mubr.bf16.gmra.mrb[0].mxu0 %v697
      %v739 = vpop.f32.mrb[0].mxu0
      %v740 = vadd.f32 %v644, %v739
      %v741 = vpop.f32.mrb[0].mxu0
      %v742 = vpop.f32.mrb[0].mxu0
      %v743 = vadd.f32 %v649, %v742
      %v744 = vpop.f32.mrb[0].mxu0
      %745 = vmatprep.mubr.bf16.mxu0 0
      %746 = vmatmul.mubr.bf16.gmra.mrb[0].mxu0 %v698
      %v747 = vpop.f32.mrb[0].mxu0
      %v748 = vadd.f32 %v654, %v747
      %v749 = vpop.f32.mrb[0].mxu0
      %v750 = vpop.f32.mrb[0].mxu0
      %v751 = vadd.f32 %v659, %v750
      %v752 = vpop.f32.mrb[0].mxu0
      %753 = vmatprep.mubr.bf16.mxu0 0
      %754 = vmatmul.mubr.bf16.gmra.mrb[0].mxu0 %v699
      %v755 = vpop.f32.mrb[0].mxu0
      %v756 = vadd.f32 %v664, %v755
      %v757 = vpop.f32.mrb[0].mxu0
      %v758 = vpop.f32.mrb[0].mxu0
      %v759 = vadd.f32 %v669, %v758
      %v760 = vpop.f32.mrb[0].mxu0
      %761 = vmatprep.mubr.bf16.mxu0 0
      %762 = vmatmul.mubr.bf16.gmra.mrb[0].mxu0 %v700
      %v763 = vpop.f32.mrb[0].mxu0
      %v764 = vadd.f32 %v674, %v763
      %v765 = vpop.f32.mrb[0].mxu0
      %v766 = vpop.f32.mrb[0].mxu0
      %v767 = vadd.f32 %v679, %v766
      %v768 = vpop.f32.mrb[0].mxu0
      %769 = vdwg.mxu0
      %v770 = vmax.f32 %v740, 0.0
      %v771 = vmax.f32 %v743, 0.0
      %v772 = vmax.f32 %v748, 0.0
      %v773 = vmax.f32 %v751, 0.0
      %v774 = vmax.f32 %v756, 0.0
      %v775 = vmax.f32 %v759, 0.0
      %v776 = vmax.f32 %v764, 0.0
      %v777 = vmax.f32 %v767, 0.0
      %v778 = vld [vmem:[%s5] sm:$0xff]
      %v779 = vld [vmem:[%s5 + $0x8] sm:$0xff]
      %v780 = vld [vmem:[%s5 + $0x10] sm:$0xff]
      %v781 = vld [vmem:[%s5 + $0x18] sm:$0xff]
      %v782 = vld [vmem:[%s5 + $0x20] sm:$0xff]
      %v783 = vld [vmem:[%s5 + $0x28] sm:$0xff]
      %v784 = vld [vmem:[%s5 + $0x30] sm:$0xff]
      %v785 = vld [vmem:[%s5 + $0x38] sm:$0xff]
      %787 = vset.pattern.permute.xlu0 0
      %788 = vperm.xlu0 %787, %v778
      %v789 = vpop.permute.xlu0 %788
      %792 = vset.pattern.permute.xlu0 0
      %793 = vperm.xlu0 %792, %v779
      %v794 = vpop.permute.xlu0 %793
      %797 = vset.pattern.permute.xlu0 0
      %798 = vperm.xlu0 %797, %v780
      %v799 = vpop.permute.xlu0 %798
      %802 = vset.pattern.permute.xlu0 0
      %803 = vperm.xlu0 %802, %v781
      %v804 = vpop.permute.xlu0 %803
      %807 = vset.pattern.permute.xlu0 0
      %808 = vperm.xlu0 %807, %v782
      %v809 = vpop.permute.xlu0 %808
      %812 = vset.pattern.permute.xlu0 0
      %813 = vperm.xlu0 %812, %v783
      %v814 = vpop.permute.xlu0 %813
      %817 = vset.pattern.permute.xlu0 0
      %818 = vperm.xlu0 %817, %v784
      %v819 = vpop.permute.xlu0 %818
      %822 = vset.pattern.permute.xlu0 0
      %823 = vperm.xlu0 %822, %v785
      %v824 = vpop.permute.xlu0 %823
      %v826 = vmul.f32 %v770, %v789
      %v827 = vmul.f32 %v771, %v794
      %v828 = vmul.f32 %v772, %v799
      %v829 = vmul.f32 %v773, %v804
      %v830 = vmul.f32 %v774, %v809
      %v831 = vmul.f32 %v775, %v814
      %v832 = vmul.f32 %v776, %v819
      %v833 = vmul.f32 %v777, %v824
      %v834 = vadd.f32 %v826, %v827
      %v835 = vadd.f32 %v834, %v828
      %v836 = vadd.f32 %v835, %v829
      %v837 = vadd.f32 %v836, %v830
      %v838 = vadd.f32 %v837, %v831
      %v839 = vadd.f32 %v838, %v832
      %v840 = vadd.f32 %v839, %v833
      %v841 = vrot.slane %v840, 4
      %v842 = vadd.f32 %v840, %v841
      %v843 = vrot.slane %v842, 2
      %v844 = vadd.f32 %v842, %v843
      %v845 = vrot.slane %v844, 1
      %v846 = vadd.f32 %v844, %v845
      %s847 = sld [smem:[#allocation2]]
      %v848 = vstv %s847
      %v849 = vadd.f32 %v846, %v848
      %850 = vst [vmem:[%s277] sm:$0x1] %v849
      %p851 = scmp.lt.s32.totalorder %s19, 2
      %s852 = scalar_select %p851, %s19, 2
      %s853 = scalar_lea.vmem %s7, %s852
      // Predicated region
      $region49: #{octinet_forward.1} parent=47 // pred_check
        %p854 = pneg %p189
      $region50: #{octinet_forward.1} parent=47 // pred_check_branch
        %856 = sbr.rel (%p854) target = $region52
      $region51: #{octinet_forward.1} parent=47 // pred_region
        _
      $region52: #{octinet_forward.1} parent=47 // pred_fallthru
        _
    $region48: #{octinet_forward.1} parent=5 // pred_fallthru
      _
    %p857 = scmp.le.s32.totalorder 2, %s14
    // Predicated region
    $region53: #{octinet_forward.1} parent=5 // pred_check
      %p858 = pneg %p857
    $region54: #{octinet_forward.1} parent=5 // pred_check_branch
      %860 = sbr.rel (%p858) target = $region56
    $region55: #{octinet_forward.1} parent=5 // pred_region
      %s861 = ssub.s32 %s14, 2
      // Predicated region
      $region57: #{octinet_forward.1} parent=55 // pred_check
        %p862 = pneg %p195
      $region58: #{octinet_forward.1} parent=55 // pred_check_branch
        %864 = sbr.rel (%p862) target = $region60
      $region59: #{octinet_forward.1} parent=55 // pred_region
        %p865 = scmp.lt.s32.totalorder %s20, 2
        %s866 = scalar_select %p865, %s20, 2
        %s867 = scalar_lea.vmem %s7, %s866
      $region60: #{octinet_forward.1} parent=55 // pred_fallthru
        _
    $region56: #{octinet_forward.1} parent=5 // pred_fallthru
      _
  $region6: #{octinet_forward.1} parent=0 // loop_footer
    %s18 = sadd.s32 1, %s14
  $region7: #{octinet_forward.1} parent=0 // loop_footer_branch
    %13 = sbr.rel target = $region3
  $region8: #{octinet_forward.1} parent=0 // loop_exit
    _

</llo_original>
